<compile_context>
chip_gen: v5e
topology: v5e:2x2
jax: 0.10.0
libtpu: 0.0.40
codegen_flags: <defaults>
</compile_context>

<pallas_src>
import functools

import jax
import jax.numpy as jnp
from jax.experimental import pallas as pl
from jax.experimental.pallas import tpu as pltpu


def _u_dot_v_gather_kernel(hsrc_t_ref, hdst_t_ref, sid_ref, did_ref, o_ref):
    # hsrc_t_ref: (D, N_src)  transposed source-type node features (VMEM-resident)
    # hdst_t_ref: (D, N_dst)  transposed destination-type node features (VMEM-resident)
    # sid_ref, did_ref: (1, TILE_E) int32 endpoint ids for this tile of edges
    # o_ref: (1, TILE_E) f32 per-edge scores (lane-dense)
    _, n_src = hsrc_t_ref.shape
    _, n_dst = hdst_t_ref.shape
    t = o_ref.shape[-1]

    sid = sid_ref[...]  # (1, T) int32
    did = did_ref[...]  # (1, T) int32

    # One-hot gather of endpoint features via the MXU (node tables live in VMEM).
    oh_s = (jax.lax.broadcasted_iota(jnp.int32, (n_src, t), 0) == sid).astype(
        hsrc_t_ref.dtype
    )  # (N_src, T)
    oh_d = (jax.lax.broadcasted_iota(jnp.int32, (n_dst, t), 0) == did).astype(
        hdst_t_ref.dtype
    )  # (N_dst, T)

    u_t = jnp.dot(hsrc_t_ref[...], oh_s, preferred_element_type=jnp.float32)  # (D, T)
    v_t = jnp.dot(hdst_t_ref[...], oh_d, preferred_element_type=jnp.float32)  # (D, T)

    # Reduce over the hidden dim (sublane axis) -> lane-dense (1, T) f32 score row.
    o_ref[...] = jnp.sum(u_t * v_t, axis=0, keepdims=True)


@functools.partial(jax.jit, static_argnames=("tile_e",))
def hetero_dot_product_predictor(h_src, h_dst, src_ids, dst_ids, *, tile_e=1024):
    """score[e] = <h_src[src_ids[e]], h_dst[dst_ids[e]]>  -> shape [E], dtype f32."""
    e = src_ids.shape[0]
    n_src, d = h_src.shape
    n_dst, _ = h_dst.shape

    # Clamp the edge tile so tiny edge lists don't over-pad; keep it lane aligned.
    tile = min(tile_e, max(128, pl.cdiv(e, 128) * 128))
    num_tiles = pl.cdiv(e, tile)
    e_pad = num_tiles * tile

    # Only the cheap int32 id vectors are padded (never the (E, D) features).
    sid = jnp.pad(src_ids.astype(jnp.int32), (0, e_pad - e)).reshape(num_tiles, tile)
    did = jnp.pad(dst_ids.astype(jnp.int32), (0, e_pad - e)).reshape(num_tiles, tile)

    # Tiny one-time transpose of the node tables so gathered features are lane-major.
    h_src_t = h_src.T  # (D, N_src)
    h_dst_t = h_dst.T  # (D, N_dst)

    out = pl.pallas_call(
        _u_dot_v_gather_kernel,
        out_shape=jax.ShapeDtypeStruct((num_tiles, tile), jnp.float32),
        grid=(num_tiles,),
        in_specs=[
            pl.BlockSpec((d, n_src), lambda i: (0, 0)),  # resident src node table
            pl.BlockSpec((d, n_dst), lambda i: (0, 0)),  # resident dst node table
            pl.BlockSpec((1, tile), lambda i: (i, 0)),   # per-tile src ids
            pl.BlockSpec((1, tile), lambda i: (i, 0)),   # per-tile dst ids
        ],
        out_specs=pl.BlockSpec((1, tile), lambda i: (i, 0)),
        compiler_params=pltpu.CompilerParams(
            dimension_semantics=("parallel",),
        ),
    )(h_src_t, h_dst_t, sid, did)

    # .squeeze() in the reference: [E, 1] -> [E]; drop the pad tail.
    return out.reshape(e_pad)[:e]


if __name__ == "__main__":
    key = jax.random.PRNGKey(0)
    k_src, k_dst, k_e0, k_e1 = jax.random.split(key, 4)

    n_src, n_dst, hidden, n_edges = 16, 16, 32, 256

    # Heterogeneous node features for the two endpoint node types of `etype`.
    h_src = jax.random.normal(k_src, (n_src, hidden), dtype=jnp.float32)
    h_dst = jax.random.normal(k_dst, (n_dst, hidden), dtype=jnp.float32)

    # Edge list of the requested etype.
    src_ids = jax.random.randint(k_e0, (n_edges,), 0, n_src, dtype=jnp.int32)
    dst_ids = jax.random.randint(k_e1, (n_edges,), 0, n_dst, dtype=jnp.int32)

    scores = hetero_dot_product_predictor(h_src, h_dst, src_ids, dst_ids)
    scores = jax.block_until_ready(scores)

    # Pure-JAX reference (== DGL u_dot_v followed by squeeze).
    ref = jnp.sum(h_src[src_ids] * h_dst[dst_ids], axis=-1)
    assert scores.shape == (n_edges,)
    assert scores.dtype == jnp.float32
    assert jnp.allclose(scores, ref, atol=1e-5, rtol=1e-5)

    print("KERNEL_OK")
</pallas_src>

<mosaic_0001>
module attributes {stable_mosaic.version = 11 : i64} {
  func.func @_u_dot_v_gather_kernel(%arg0: i32, %arg1: memref<32x16xf32, #tpu.memory_space<vmem>>, %arg2: memref<32x16xf32, #tpu.memory_space<vmem>>, %arg3: memref<1x256xi32, #tpu.memory_space<vmem>>, %arg4: memref<1x256xi32, #tpu.memory_space<vmem>>, %arg5: memref<1x256xf32, #tpu.memory_space<vmem>>) attributes {dimension_semantics = [#tpu.dimension_semantics<parallel>], iteration_bounds = array<i64: 1>, scalar_prefetch = 0 : i64, scratch_operands = 0 : i64, tpu.core_type = #tpu.core_type<tc>, window_params = [{pipeline_mode = #tpu.pipeline_mode<synchronous>, transform_indices = @transform_0, window_bounds = array<i64: 32, 16>}, {pipeline_mode = #tpu.pipeline_mode<synchronous>, transform_indices = @transform_1, window_bounds = array<i64: 32, 16>}, {transform_indices = @transform_2, window_bounds = array<i64: 1, 256>}, {transform_indices = @transform_3, window_bounds = array<i64: 1, 256>}, {transform_indices = @transform_4, window_bounds = array<i64: 1, 256>}]} {
    %c0 = arith.constant 0 : index
    %c0_0 = arith.constant 0 : index
    %0 = vector.load %arg3[%c0, %c0_0] : memref<1x256xi32, #tpu.memory_space<vmem>>, vector<1x256xi32>
    %c0_1 = arith.constant 0 : index
    %c0_2 = arith.constant 0 : index
    %1 = vector.load %arg4[%c0_1, %c0_2] : memref<1x256xi32, #tpu.memory_space<vmem>>, vector<1x256xi32>
    %2 = tpu.iota {dimensions = array<i32: 0>} : vector<16x256xi32>
    %3 = vector.broadcast %0 : vector<1x256xi32> to vector<16x256xi32>
    %4 = arith.cmpi eq, %2, %3 : vector<16x256xi32>
    %5 = arith.extui %4 : vector<16x256xi1> to vector<16x256xi32>
    %6 = arith.sitofp %5 : vector<16x256xi32> to vector<16x256xf32>
    %7 = tpu.iota {dimensions = array<i32: 0>} : vector<16x256xi32>
    %8 = vector.broadcast %1 : vector<1x256xi32> to vector<16x256xi32>
    %9 = arith.cmpi eq, %7, %8 : vector<16x256xi32>
    %10 = arith.extui %9 : vector<16x256xi1> to vector<16x256xi32>
    %11 = arith.sitofp %10 : vector<16x256xi32> to vector<16x256xf32>
    %c0_3 = arith.constant 0 : index
    %c0_4 = arith.constant 0 : index
    %12 = vector.load %arg1[%c0_3, %c0_4] : memref<32x16xf32, #tpu.memory_space<vmem>>, vector<32x16xf32>
    %cst = arith.constant dense<0.000000e+00> : vector<32x256xf32>
    %13 = tpu.matmul %12, %6, %cst {dimension_numbers = #tpu.dot_dimension_numbers<[1], [0], [0], [1], [0, 0, 1, 1], [], []>} : vector<32x16xf32>, vector<16x256xf32>, vector<32x256xf32> -> vector<32x256xf32>
    %c0_5 = arith.constant 0 : index
    %c0_6 = arith.constant 0 : index
    %14 = vector.load %arg2[%c0_5, %c0_6] : memref<32x16xf32, #tpu.memory_space<vmem>>, vector<32x16xf32>
    %cst_7 = arith.constant dense<0.000000e+00> : vector<32x256xf32>
    %15 = tpu.matmul %14, %11, %cst_7 {dimension_numbers = #tpu.dot_dimension_numbers<[1], [0], [0], [1], [0, 0, 1, 1], [], []>} : vector<32x16xf32>, vector<16x256xf32>, vector<32x256xf32> -> vector<32x256xf32>
    %16 = arith.mulf %13, %15 : vector<32x256xf32>
    %cst_8 = arith.constant dense<0.000000e+00> : vector<256xf32>
    %17 = vector.multi_reduction <add>, %16, %cst_8 [0] : vector<32x256xf32> to vector<256xf32>
    %18 = vector.shape_cast %17 : vector<256xf32> to vector<1x256xf32>
    %c0_9 = arith.constant 0 : index
    %c0_10 = arith.constant 0 : index
    %19 = vector.load %arg5[%c0_9, %c0_10] : memref<1x256xf32, #tpu.memory_space<vmem>>, vector<1x256xf32>
    tpu.vector_store %arg5[%c0_9, %c0_10], %18 {strides = array<i32>} : memref<1x256xf32, #tpu.memory_space<vmem>>, vector<1x256xf32>,
    return
  }
  func.func @transform_0(%arg0: i32) -> (i32, i32) {
    %c0_i32 = arith.constant 0 : i32
    %c0_i32_0 = arith.constant 0 : i32
    %c0_i32_1 = arith.constant 0 : i32
    return %c0_i32, %c0_i32_0 : i32, i32
  }
  func.func @transform_1(%arg0: i32) -> (i32, i32) {
    %c0_i32 = arith.constant 0 : i32
    %c0_i32_0 = arith.constant 0 : i32
    %c0_i32_1 = arith.constant 0 : i32
    return %c0_i32, %c0_i32_0 : i32, i32
  }
  func.func @transform_2(%arg0: i32) -> (i32, i32) {
    %c0_i32 = arith.constant 0 : i32
    %c0_i32_0 = arith.constant 0 : i32
    return %arg0, %c0_i32 : i32, i32
  }
  func.func @transform_3(%arg0: i32) -> (i32, i32) {
    %c0_i32 = arith.constant 0 : i32
    %c0_i32_0 = arith.constant 0 : i32
    return %arg0, %c0_i32 : i32, i32
  }
  func.func @transform_4(%arg0: i32) -> (i32, i32) {
    %c0_i32 = arith.constant 0 : i32
    %c0_i32_0 = arith.constant 0 : i32
    return %arg0, %c0_i32 : i32, i32
  }
}

</mosaic_0001>

<llo_original>
// kernel: hetero_dot_product_predictor.1
$region0: #{hetero_dot_product_predictor.1}
  #allocation0 [shape = 'u32[]', space=smem, size = 0x4, offset = 0x4, fixed_abs, tag = 'smem constant byte address 0x4 - core index']
  #allocation1 [shape = 'u32[72,128]{1,0:T(1,128)}', space=vmem, size = 0x9000, scoped, tag = 'internal scratch']
  %s0 = inlined_call_operand.vmem [shape: f32[32,16], index: 0, kind: input, shape index: {}]
  %s1 = inlined_call_operand.vmem [shape: f32[32,16], index: 1, kind: input, shape index: {}]
  %s2 = inlined_call_operand.vmem [shape: s32[1,256], index: 2, kind: input, shape index: {}]
  %s3 = inlined_call_operand.vmem [shape: s32[1,256], index: 3, kind: input, shape index: {}]
  %s4 = inlined_call_operand.hbm [shape: f32[1,256], index: 4, kind: output, shape index: {}]
  %s5 = sld [smem:[#allocation0]]
  $region26: #{hetero_dot_product_predictor.1} parent=0
    _
  %s7 = ssub.s32 1, %s5
  %s8 = scalar_select 0, %s7, %s5
  $region1: #{hetero_dot_product_predictor.1} parent=0
    #allocation2 [shape = 'u8[1024]{0}', space=vmem, size = 0x400, scoped, tag = 'output window, operand 0, single buffered']
    #allocation3 [shape = 's32[1]{0}', space=sflag, size = 0x4, scoped, tag = 'scoped memory for hetero_dot_product_predictor.1']
    %9 = vsyncpa [#allocation3], 0
    // Predicated region
    $region2: #{hetero_dot_product_predictor.1} parent=1 // pred_check
      _
    $region3: #{hetero_dot_product_predictor.1} parent=1 // pred_check_branch
      %11 = sbr.rel (0) target = $region5
    $region4: #{hetero_dot_product_predictor.1} parent=1 // pred_region
      _
    $region5: #{hetero_dot_product_predictor.1} parent=1 // pred_fallthru
      _
    // Predicated region
    $region6: #{hetero_dot_product_predictor.1} parent=1 // pred_check
      _
    $region7: #{hetero_dot_product_predictor.1} parent=1 // pred_check_branch
      %13 = sbr.rel (0) target = $region9
    $region8: #{hetero_dot_product_predictor.1} parent=1 // pred_region
      _
    $region9: #{hetero_dot_product_predictor.1} parent=1 // pred_fallthru
      _
    // Predicated region
    $region10: #{hetero_dot_product_predictor.1} parent=1 // pred_check
      _
    $region11: #{hetero_dot_product_predictor.1} parent=1 // pred_check_branch
      %15 = sbr.rel (0) target = $region13
    $region12: #{hetero_dot_product_predictor.1} parent=1 // pred_region
      _
    $region13: #{hetero_dot_product_predictor.1} parent=1 // pred_fallthru
      _
    // Predicated region
    $region14: #{hetero_dot_product_predictor.1} parent=1 // pred_check
      _
    $region15: #{hetero_dot_product_predictor.1} parent=1 // pred_check_branch
      %17 = sbr.rel (0) target = $region17
    $region16: #{hetero_dot_product_predictor.1} parent=1 // pred_region
      _
    $region17: #{hetero_dot_product_predictor.1} parent=1 // pred_fallthru
      _
    %v18 = vld [vmem:[%s2] sm:$0x3]
    %v19 = vld [vmem:[%s3] sm:$0x3]
    %v20 = vlaneseq
    %v21 = vshrl.u32 %v20, 7
    %v22 = vadd.s32 %v21, 8
    %v23 = vperm.slane %v18, 0
    %v24 = vperm.slane %v18, 1
    %vm25 = vcmp.eq.s32.totalorder %v21, %v23
    %vm26 = vcmp.eq.s32.totalorder %v21, %v24
    %vm27 = vcmp.eq.s32.totalorder %v22, %v23
    %vm28 = vcmp.eq.s32.totalorder %v22, %v24
    %v29 = vsel %vm25, 1, 0
    %v30 = vsel %vm26, 1, 0
    %v31 = vsel %vm27, 1, 0
    %v32 = vsel %vm28, 1, 0
    %v33 = vcvt.s32.f32 %v29
    %v34 = vcvt.s32.f32 %v30
    %v35 = vcvt.s32.f32 %v31
    %v36 = vcvt.s32.f32 %v32
    %v37 = vperm.slane %v19, 0
    %v38 = vperm.slane %v19, 1
    %vm39 = vcmp.eq.s32.totalorder %v21, %v37
    %vm40 = vcmp.eq.s32.totalorder %v21, %v38
    %vm41 = vcmp.eq.s32.totalorder %v22, %v37
    %vm42 = vcmp.eq.s32.totalorder %v22, %v38
    %v43 = vsel %vm39, 1, 0
    %v44 = vsel %vm40, 1, 0
    %v45 = vsel %vm41, 1, 0
    %v46 = vsel %vm42, 1, 0
    %v47 = vcvt.s32.f32 %v43
    %v48 = vcvt.s32.f32 %v44
    %v49 = vcvt.s32.f32 %v45
    %v50 = vcvt.s32.f32 %v46
    %v51 = vld [vmem:[%s0] sm:$0xff]
    %v52 = vld [vmem:[%s0 + $0x8] sm:$0xff]
    %v53 = vld [vmem:[%s0 + $0x10] sm:$0xff]
    %v54 = vld [vmem:[%s0 + $0x18] sm:$0xff]
    %vm55 = vcmask 130048
    %v57 = vsel %vm55, %v51, 0
    %v60 = vsel %vm55, %v52, 0
    %v63 = vsel %vm55, %v53, 0
    %v66 = vsel %vm55, %v54, 0
    %68 = vmatpush.msra.mxu0 0.0
    %69 = vmatpush.msra.mxu0 0.0
    %70 = vmatpush.msra.mxu0 0.0
    %71 = vmatpush.msra.mxu0 0.0
    %72 = vmatpush.msra.mxu0 0.0
    %73 = vmatpush.msra.mxu0 0.0
    %74 = vmatpush.msra.mxu0 0.0
    %75 = vmatpush.msra.mxu0 0.0
    %76 = vmatpush.msra.mxu0 0.0
    %77 = vmatpush.msra.mxu0 0.0
    %78 = vmatpush.msra.mxu0 0.0
    %79 = vmatpush.msra.mxu0 0.0
    %80 = vmatpush.msra.mxu0 0.0
    %81 = vmatpush.msra.mxu0 0.0
    %82 = vmatpush.msra.mxu0 %v35
    %83 = vmatpush.msra.mxu0 %v33
    %84 = vmatmul.f32.gmra.mxu0 %v57
    %v85 = vpop.f32.mrf.mxu0
    %v86 = vadd.f32 0.0, %v85
    %87 = vmatmul.f32.gmra.mxu0 %v60
    %v88 = vpop.f32.mrf.mxu0
    %v89 = vadd.f32 0.0, %v88
    %90 = vmatmul.f32.gmra.mxu0 %v63
    %v91 = vpop.f32.mrf.mxu0
    %v92 = vadd.f32 0.0, %v91
    %93 = vmatmul.f32.gmra.mxu0 %v66
    %v94 = vpop.f32.mrf.mxu0
    %v95 = vadd.f32 0.0, %v94
    %96 = vdwg.mxu0
    %97 = vmatpush.msra.mxu0 0.0
    %98 = vmatpush.msra.mxu0 0.0
    %99 = vmatpush.msra.mxu0 0.0
    %100 = vmatpush.msra.mxu0 0.0
    %101 = vmatpush.msra.mxu0 0.0
    %102 = vmatpush.msra.mxu0 0.0
    %103 = vmatpush.msra.mxu0 0.0
    %104 = vmatpush.msra.mxu0 0.0
    %105 = vmatpush.msra.mxu0 0.0
    %106 = vmatpush.msra.mxu0 0.0
    %107 = vmatpush.msra.mxu0 0.0
    %108 = vmatpush.msra.mxu0 0.0
    %109 = vmatpush.msra.mxu0 0.0
    %110 = vmatpush.msra.mxu0 0.0
    %111 = vmatpush.msra.mxu0 %v36
    %112 = vmatpush.msra.mxu0 %v34
    %113 = vmatmul.f32.gmra.mxu0 %v57
    %v114 = vpop.f32.mrf.mxu0
    %v115 = vadd.f32 0.0, %v114
    %116 = vmatmul.f32.gmra.mxu0 %v60
    %v117 = vpop.f32.mrf.mxu0
    %v118 = vadd.f32 0.0, %v117
    %119 = vmatmul.f32.gmra.mxu0 %v63
    %v120 = vpop.f32.mrf.mxu0
    %v121 = vadd.f32 0.0, %v120
    %122 = vmatmul.f32.gmra.mxu0 %v66
    %v123 = vpop.f32.mrf.mxu0
    %v124 = vadd.f32 0.0, %v123
    %125 = vdwg.mxu0
    %v126 = vld [vmem:[%s1] sm:$0xff]
    %v127 = vld [vmem:[%s1 + $0x8] sm:$0xff]
    %v128 = vld [vmem:[%s1 + $0x10] sm:$0xff]
    %v129 = vld [vmem:[%s1 + $0x18] sm:$0xff]
    %v131 = vsel %vm55, %v126, 0
    %v134 = vsel %vm55, %v127, 0
    %v137 = vsel %vm55, %v128, 0
    %v140 = vsel %vm55, %v129, 0
    %142 = vmatpush.msra.mxu0 0.0
    %143 = vmatpush.msra.mxu0 0.0
    %144 = vmatpush.msra.mxu0 0.0
    %145 = vmatpush.msra.mxu0 0.0
    %146 = vmatpush.msra.mxu0 0.0
    %147 = vmatpush.msra.mxu0 0.0
    %148 = vmatpush.msra.mxu0 0.0
    %149 = vmatpush.msra.mxu0 0.0
    %150 = vmatpush.msra.mxu0 0.0
    %151 = vmatpush.msra.mxu0 0.0
    %152 = vmatpush.msra.mxu0 0.0
    %153 = vmatpush.msra.mxu0 0.0
    %154 = vmatpush.msra.mxu0 0.0
    %155 = vmatpush.msra.mxu0 0.0
    %156 = vmatpush.msra.mxu0 %v49
    %157 = vmatpush.msra.mxu0 %v47
    %158 = vmatmul.f32.gmra.mxu0 %v131
    %v159 = vpop.f32.mrf.mxu0
    %v160 = vadd.f32 0.0, %v159
    %161 = vmatmul.f32.gmra.mxu0 %v134
    %v162 = vpop.f32.mrf.mxu0
    %v163 = vadd.f32 0.0, %v162
    %164 = vmatmul.f32.gmra.mxu0 %v137
    %v165 = vpop.f32.mrf.mxu0
    %v166 = vadd.f32 0.0, %v165
    %167 = vmatmul.f32.gmra.mxu0 %v140
    %v168 = vpop.f32.mrf.mxu0
    %v169 = vadd.f32 0.0, %v168
    %170 = vdwg.mxu0
    %171 = vmatpush.msra.mxu0 0.0
    %172 = vmatpush.msra.mxu0 0.0
    %173 = vmatpush.msra.mxu0 0.0
    %174 = vmatpush.msra.mxu0 0.0
    %175 = vmatpush.msra.mxu0 0.0
    %176 = vmatpush.msra.mxu0 0.0
    %177 = vmatpush.msra.mxu0 0.0
    %178 = vmatpush.msra.mxu0 0.0
    %179 = vmatpush.msra.mxu0 0.0
    %180 = vmatpush.msra.mxu0 0.0
    %181 = vmatpush.msra.mxu0 0.0
    %182 = vmatpush.msra.mxu0 0.0
    %183 = vmatpush.msra.mxu0 0.0
    %184 = vmatpush.msra.mxu0 0.0
    %185 = vmatpush.msra.mxu0 %v50
    %186 = vmatpush.msra.mxu0 %v48
    %187 = vmatmul.f32.gmra.mxu0 %v131
    %v188 = vpop.f32.mrf.mxu0
    %v189 = vadd.f32 0.0, %v188
    %190 = vmatmul.f32.gmra.mxu0 %v134
    %v191 = vpop.f32.mrf.mxu0
    %v192 = vadd.f32 0.0, %v191
    %193 = vmatmul.f32.gmra.mxu0 %v137
    %v194 = vpop.f32.mrf.mxu0
    %v195 = vadd.f32 0.0, %v194
    %196 = vmatmul.f32.gmra.mxu0 %v140
    %v197 = vpop.f32.mrf.mxu0
    %v198 = vadd.f32 0.0, %v197
    %199 = vdwg.mxu0
    %v200 = vmul.f32 %v86, %v160
    %v201 = vmul.f32 %v115, %v189
    %v202 = vmul.f32 %v89, %v163
    %v203 = vmul.f32 %v118, %v192
    %v204 = vmul.f32 %v92, %v166
    %v205 = vmul.f32 %v121, %v195
    %v206 = vmul.f32 %v95, %v169
    %v207 = vmul.f32 %v124, %v198
    %v208 = vadd.f32 %v200, %v202
    %v209 = vadd.f32 %v208, %v204
    %v210 = vadd.f32 %v209, %v206
    %v211 = vrot.slane %v210, 4
    %v212 = vadd.f32 %v210, %v211
    %v213 = vrot.slane %v212, 2
    %v214 = vadd.f32 %v212, %v213
    %v215 = vrot.slane %v214, 1
    %v216 = vadd.f32 %v214, %v215
    %v217 = vadd.f32 %v201, %v203
    %v218 = vadd.f32 %v217, %v205
    %v219 = vadd.f32 %v218, %v207
    %v220 = vrot.slane %v219, 4
    %v221 = vadd.f32 %v219, %v220
    %v222 = vrot.slane %v221, 2
    %v223 = vadd.f32 %v221, %v222
    %v224 = vrot.slane %v223, 1
    %v225 = vadd.f32 %v223, %v224
    %v228 = vrot.slane %v225, 7
    %vm229 = vcmask 1040384
    %v230 = vsel %vm229, %v216, %v228
    %v232 = vlaneseq
    %vm233 = vcmp.ge.s32.totalorder %v232, 0
    %vm234 = vcmp.lt.s32.totalorder %v232, 256
    %vm235 = vmand %vm233, %vm234
    %236 = vst.msk [vmem:[#allocation2] sm:$0x3] %vm235, %v230
    // Predicated region
    $region18: #{hetero_dot_product_predictor.1} parent=1 // pred_check
      _
    $region19: #{hetero_dot_product_predictor.1} parent=1 // pred_check_branch
      %238 = sbr.rel (0) target = $region21
    $region20: #{hetero_dot_product_predictor.1} parent=1 // pred_region
      %240 = vsyncadd [#allocation3], 0
      %s242 = sshll.u32 [#allocation2], 4
      %s243 = int_to_ptr.vmem [resolvable:$true] %s242
      %s244 = sshll.u32 %s4, 4
      %s245 = int_to_ptr.hbm [resolvable:$true] %s244
      %247 = dma.vmem_to_hbm [thread:$0]  %s243, 32, %s245, [#allocation3]
    $region21: #{hetero_dot_product_predictor.1} parent=1 // pred_fallthru
      _
    // Predicated region
    $region22: #{hetero_dot_product_predictor.1} parent=1 // pred_check
      _
    $region23: #{hetero_dot_product_predictor.1} parent=1 // pred_check_branch
      %249 = sbr.rel (0) target = $region25
    $region24: #{hetero_dot_product_predictor.1} parent=1 // pred_region
      %251 = dma.done [#allocation3], 32
    $region25: #{hetero_dot_product_predictor.1} parent=1 // pred_fallthru
      _
    %252 = vsyncpa [#allocation3], 1

</llo_original>
